<compile_context>
chip_gen: v7x
topology: tpu7x:2x2x1
jax: 0.10.0
libtpu: 0.0.40
codegen_flags: <defaults>
</compile_context>

<pallas_src>
import jax
import jax.numpy as jnp
from jax.experimental import pallas as pl
from jax.experimental.pallas import tpu as pltpu

_IGNORE_INDEX = -100


def _round_up(x, m):
    return ((x + m - 1) // m) * m


def _default_tile_n():
    # v7x: ~3.2 TB/s HBM per TC -> carry >= 1-2 MB per grid step.
    try:
        kind = jax.devices()[0].device_kind.lower()
        if "v7" in kind:
            return 65536
    except Exception:
        pass
    return 32768


def _block_vmem_bytes(rows, dtype, cols):
    """Bytes one (rows, cols) block occupies in VMEM incl. sublane padding."""
    itemsize = jnp.dtype(dtype).itemsize
    sublane_mult = {4: 8, 2: 16, 1: 32}[itemsize]
    return _round_up(max(rows, 1), sublane_mult) * itemsize * cols


def _prep_lane_dense(logits, targets, n_pad, logits_dtype=None):
    """(N, C) logits -> (C, n_pad) lane-dense; targets -> (1, n_pad) int32.

    Padded columns carry target == -100 so the in-kernel ignore mask also
    covers padding.  Transpose + pad fuse into one XLA op (no zeros +
    dynamic-update-slice round trip over HBM).
    """
    n, c = logits.shape
    lt = logits.T
    if logits_dtype is not None and lt.dtype != jnp.dtype(logits_dtype):
        lt = lt.astype(logits_dtype)
    lt = jnp.pad(lt, ((0, 0), (0, n_pad - n)))
    tt = jnp.pad(targets.astype(jnp.int32).reshape(1, n),
                 ((0, 0), (0, n_pad - n)), constant_values=_IGNORE_INDEX)
    return lt, tt


def _make_kernel(e_tiles, n_tiles, num_tiles):
    """Fused mean-CE (edge + node) kernel, tiled over the lane (N) axis."""

    def kernel(lw_ref, e_logits_ref, e_tgt_ref, n_logits_ref, n_tgt_ref,
               out_ref, e_sum_acc, e_cnt_acc, n_sum_acc, n_cnt_acc):
        step = pl.program_id(0)

        @pl.when(step == 0)
        def _init():
            e_sum_acc[...] = jnp.zeros_like(e_sum_acc)
            e_cnt_acc[...] = jnp.zeros_like(e_cnt_acc)
            n_sum_acc[...] = jnp.zeros_like(n_sum_acc)
            n_cnt_acc[...] = jnp.zeros_like(n_cnt_acc)

        def accum(logits_ref, tgt_ref, sum_acc, cnt_acc):
            logits = logits_ref[...].astype(jnp.float32)            # (C, T)
            tgt = tgt_ref[...]                                      # (1, T) int32
            c, t = logits.shape
            # numerically-stable logsumexp over the class (sublane) axis
            m = jnp.max(logits, axis=0, keepdims=True)              # (1, T)
            lse = m + jnp.log(jnp.sum(jnp.exp(logits - m), axis=0, keepdims=True))
            # gather logit at target class via a one-hot mask (no dynamic gather)
            cls_ids = jax.lax.broadcasted_iota(jnp.int32, (c, t), 0)
            picked = jnp.sum(jnp.where(cls_ids == tgt, logits, 0.0),
                             axis=0, keepdims=True)                 # (1, T)
            valid = tgt != _IGNORE_INDEX                            # padding + ignore_index
            # keep partials lane-resident; scalar reduction happens once at finalize
            sum_acc[...] = sum_acc[...] + jnp.where(valid, lse - picked, 0.0)
            cnt_acc[...] = cnt_acc[...] + valid.astype(jnp.float32)

        if e_tiles == num_tiles:
            accum(e_logits_ref, e_tgt_ref, e_sum_acc, e_cnt_acc)
        else:
            @pl.when(step < e_tiles)
            def _edge():
                accum(e_logits_ref, e_tgt_ref, e_sum_acc, e_cnt_acc)

        if n_tiles == num_tiles:
            accum(n_logits_ref, n_tgt_ref, n_sum_acc, n_cnt_acc)
        else:
            @pl.when(step < n_tiles)
            def _node():
                accum(n_logits_ref, n_tgt_ref, n_sum_acc, n_cnt_acc)

        @pl.when(step == pl.num_programs(0) - 1)
        def _finalize():
            sum_e = jnp.sum(e_sum_acc[...])
            cnt_e = jnp.sum(e_cnt_acc[...])
            sum_n = jnp.sum(n_sum_acc[...])
            cnt_n = jnp.sum(n_cnt_acc[...])
            # Empty / all-ignored streams return 0 (module's `len(...) > 0 else 0`
            # branch; torch's all-ignored mean CE would be NaN instead).
            loss_cell = jnp.where(cnt_e > 0.0, sum_e / jnp.maximum(cnt_e, 1.0), 0.0)
            loss_cls = jnp.where(cnt_n > 0.0, sum_n / jnp.maximum(cnt_n, 1.0), 0.0)
            lw = lw_ref[...]                                        # (1, 1)
            safe_cls = jnp.where(loss_cls != 0.0, loss_cls, 1.0)
            ratio = jnp.where(loss_cls != 0.0, loss_cell / safe_cls, 0.0)
            lw_eff = jnp.where(lw == -1.0, ratio, lw)               # (1, 1)
            total = lw_eff * loss_cls + loss_cell                   # (1, 1)
            lane = jax.lax.broadcasted_iota(jnp.int32, (1, 128), 1)
            out_ref[...] = jnp.where(
                lane == 0, loss_cell,
                jnp.where(lane == 1, loss_cls,
                          jnp.where(lane == 2, total, 0.0)))

    return kernel


def graph_layout_loss(outputs, cls_targets, loss_weight=1.0, *,
                      tile_n=None, logits_dtype=None):
    """Forward pass of GraphLayoutLoss (default flags) with one fused kernel."""
    edge_logits = outputs["pair_cell_score_list"]   # (E, C_e)
    edge_targets = outputs["pair_cell_target"]      # (E,)
    node_logits = outputs["node_score_list"]        # (N, C_n)

    n_e, c_e = edge_logits.shape
    n_n, c_n = node_logits.shape

    if tile_n is None:
        tile_n = _default_tile_n()

    # lane tile (multiple of 128), no larger than the longest stream needs
    n_max = max(n_e, n_n, 1)
    tile = min(_round_up(tile_n, 128), _round_up(n_max, 128))

    # per-stream padding: each stream padded only to its own tile multiple
    e_tiles = max(pl.cdiv(max(n_e, 1), tile), 1)
    n_tiles = max(pl.cdiv(max(n_n, 1), tile), 1)
    num_tiles = max(e_tiles, n_tiles)

    e_lt, e_tt = _prep_lane_dense(edge_logits, edge_targets, e_tiles * tile, logits_dtype)
    n_lt, n_tt = _prep_lane_dense(node_logits, cls_targets, n_tiles * tile, logits_dtype)
    lw = jnp.reshape(jnp.asarray(loss_weight, jnp.float32), (1, 1))

    # VMEM budget: double-buffered sublane-padded input tiles + persistent
    # (1, tile) f32 lane accumulators + f32 temporaries + headroom.
    in_bytes = 2 * (_block_vmem_bytes(c_e, e_lt.dtype, tile)
                    + _block_vmem_bytes(c_n, n_lt.dtype, tile)
                    + 2 * _block_vmem_bytes(1, jnp.int32, tile))
    acc_bytes = 4 * _block_vmem_bytes(1, jnp.float32, tile)
    temp_bytes = 6 * _block_vmem_bytes(8, jnp.float32, tile)
    vmem_limit = int(min(max(in_bytes + acc_bytes + temp_bytes + (4 << 20),
                             16 << 20), 100 << 20))

    def clamped_map(tiles):
        if tiles == num_tiles:
            return lambda i: (0, i)
        last = tiles - 1
        return lambda i: (0, jnp.minimum(i, last))

    elems = c_e * e_tiles * tile + c_n * n_tiles * tile
    cost = pl.CostEstimate(
        flops=int(8 * elems),
        transcendentals=int(elems),
        bytes_accessed=int(e_lt.size * e_lt.dtype.itemsize
                           + n_lt.size * n_lt.dtype.itemsize
                           + (e_tt.size + n_tt.size) * 4 + 128 * 4 + 4))

    out = pl.pallas_call(
        _make_kernel(e_tiles, n_tiles, num_tiles),
        out_shape=jax.ShapeDtypeStruct((1, 128), jnp.float32),
        grid_spec=pltpu.PrefetchScalarGridSpec(
            num_scalar_prefetch=0,
            grid=(num_tiles,),
            in_specs=[
                pl.BlockSpec((1, 1), lambda i: (0, 0)),              # loss_weight
                pl.BlockSpec((c_e, tile), clamped_map(e_tiles)),     # edge logits
                pl.BlockSpec((1, tile), clamped_map(e_tiles)),       # edge targets
                pl.BlockSpec((c_n, tile), clamped_map(n_tiles)),     # node logits
                pl.BlockSpec((1, tile), clamped_map(n_tiles)),       # node targets
            ],
            out_specs=pl.BlockSpec((1, 128), lambda i: (0, 0)),
            scratch_shapes=[pltpu.VMEM((1, tile), jnp.float32)] * 4,
        ),
        compiler_params=pltpu.CompilerParams(
            dimension_semantics=("arbitrary",),
            vmem_limit_bytes=vmem_limit,
        ),
        cost_estimate=cost,
    )(lw, e_lt, e_tt, n_lt, n_tt)

    return {"loss_cell": out[0, 0], "loss_cls": out[0, 1], "loss": out[0, 2]}


def _ce_reference(logits, targets, ignore_index=_IGNORE_INDEX):
    """Plain-JAX replica of torch.nn.CrossEntropyLoss (mean, default ignore_index)."""
    logits = logits.astype(jnp.float32)
    logp = jax.nn.log_softmax(logits, axis=-1)
    valid = targets != ignore_index
    safe_t = jnp.where(valid, targets, 0).astype(jnp.int32)
    picked = jnp.take_along_axis(logp, safe_t[:, None], axis=-1)[:, 0]
    return -jnp.sum(jnp.where(valid, picked, 0.0)) / jnp.maximum(
        jnp.sum(valid.astype(jnp.float32)), 1.0)


if __name__ == "__main__":
    key = jax.random.PRNGKey(0)
    k1, k2, k3, k4, k5, k6, k7, k8 = jax.random.split(key, 8)

    # --- Case 1: tiny shapes (single tile), default tile size ---------------
    num_nodes, num_classes = 8, 5
    num_pairs, num_edge_classes = 16, 2

    outputs = {
        "node_score_list": jax.random.normal(k1, (num_nodes, num_classes), jnp.float32),
        "pair_cell_score_list": jax.random.normal(k2, (num_pairs, num_edge_classes), jnp.float32),
        "pair_cell_target": jax.random.randint(k3, (num_pairs,), 0, num_edge_classes, jnp.int32),
    }
    cls_targets = jax.random.randint(k4, (num_nodes,), 0, num_classes, jnp.int32)
    cls_targets = cls_targets.at[3].set(_IGNORE_INDEX)   # exercise ignore_index=-100

    loss_fn = jax.jit(graph_layout_loss, static_argnames=("tile_n", "logits_dtype"))

    losses = loss_fn(outputs, cls_targets, loss_weight=1.0)
    jax.block_until_ready(losses["loss"])

    ref_cell = _ce_reference(outputs["pair_cell_score_list"], outputs["pair_cell_target"])
    ref_cls = _ce_reference(outputs["node_score_list"], cls_targets)
    assert jnp.allclose(losses["loss_cell"], ref_cell, rtol=1e-5, atol=1e-5)
    assert jnp.allclose(losses["loss_cls"], ref_cls, rtol=1e-5, atol=1e-5)
    assert jnp.allclose(losses["loss"], 1.0 * ref_cls + ref_cell, rtol=1e-5, atol=1e-5)

    # loss_weight == -1 ratio branch: loss = (cell/cls)*cls + cell
    losses_m1 = loss_fn(outputs, cls_targets, loss_weight=-1.0)
    jax.block_until_ready(losses_m1["loss"])
    ref_m1 = (ref_cell / ref_cls) * ref_cls + ref_cell
    assert jnp.allclose(losses_m1["loss"], ref_m1, rtol=1e-5, atol=1e-5)

    # --- Case 2: unequal E / N with multiple lane tiles ----------------------
    # (exercises per-stream padding, clamped index_maps and pl.when gating)
    num_pairs2, num_nodes2 = 300, 20
    outputs2 = {
        "node_score_list": jax.random.normal(k5, (num_nodes2, num_classes), jnp.float32),
        "pair_cell_score_list": jax.random.normal(k6, (num_pairs2, num_edge_classes), jnp.float32),
        "pair_cell_target": jax.random.randint(k7, (num_pairs2,), 0, num_edge_classes, jnp.int32),
    }
    outputs2["pair_cell_target"] = outputs2["pair_cell_target"].at[7].set(_IGNORE_INDEX)
    cls_targets2 = jax.random.randint(k8, (num_nodes2,), 0, num_classes, jnp.int32)

    losses2 = loss_fn(outputs2, cls_targets2, loss_weight=0.5, tile_n=128)
    jax.block_until_ready(losses2["loss"])
    ref_cell2 = _ce_reference(outputs2["pair_cell_score_list"], outputs2["pair_cell_target"])
    ref_cls2 = _ce_reference(outputs2["node_score_list"], cls_targets2)
    assert jnp.allclose(losses2["loss_cell"], ref_cell2, rtol=1e-5, atol=1e-5)
    assert jnp.allclose(losses2["loss_cls"], ref_cls2, rtol=1e-5, atol=1e-5)
    assert jnp.allclose(losses2["loss"], 0.5 * ref_cls2 + ref_cell2, rtol=1e-5, atol=1e-5)

    print("KERNEL_OK")
</pallas_src>

<mosaic_0001>
module attributes {stable_mosaic.version = 11 : i64} {
  func.func @kernel(%arg0: i32, %arg1: memref<1x1xf32, #tpu.memory_space<vmem>>, %arg2: memref<2x128xf32, #tpu.memory_space<vmem>>, %arg3: memref<1x128xi32, #tpu.memory_space<vmem>>, %arg4: memref<5x128xf32, #tpu.memory_space<vmem>>, %arg5: memref<1x128xi32, #tpu.memory_space<vmem>>, %arg6: memref<1x128xf32, #tpu.memory_space<vmem>>, %arg7: memref<1x128xf32, #tpu.memory_space<vmem>>, %arg8: memref<1x128xf32, #tpu.memory_space<vmem>>, %arg9: memref<1x128xf32, #tpu.memory_space<vmem>>, %arg10: memref<1x128xf32, #tpu.memory_space<vmem>>) attributes {dimension_semantics = [#tpu.dimension_semantics<arbitrary>], iteration_bounds = array<i64: 1>, scalar_prefetch = 0 : i64, scratch_operands = 4 : i64, tpu.core_type = #tpu.core_type<tc>, window_params = [{pipeline_mode = #tpu.pipeline_mode<synchronous>, transform_indices = @transform_0, window_bounds = array<i64: 1, 1>}, {transform_indices = @transform_1, window_bounds = array<i64: 2, 128>}, {transform_indices = @transform_2, window_bounds = array<i64: 1, 128>}, {transform_indices = @transform_3, window_bounds = array<i64: 5, 128>}, {transform_indices = @transform_4, window_bounds = array<i64: 1, 128>}, {pipeline_mode = #tpu.pipeline_mode<synchronous>, transform_indices = @transform_5, window_bounds = array<i64: 1, 128>}]} {
    %c0_i32 = arith.constant 0 : i32
    %0 = arith.cmpi eq, %arg0, %c0_i32 : i32
    %1 = arith.extui %0 : i1 to i32
    %c0_i32_0 = arith.constant 0 : i32
    %2 = arith.cmpi ne, %1, %c0_i32_0 : i32
    scf.if %2 {
      %cst_36 = arith.constant 0.000000e+00 : f32
      %68 = vector.broadcast %cst_36 : f32 to vector<1x128xf32>
      %c0_37 = arith.constant 0 : index
      %c0_38 = arith.constant 0 : index
      %69 = vector.load %arg7[%c0_37, %c0_38] : memref<1x128xf32, #tpu.memory_space<vmem>>, vector<1x128xf32>
      tpu.vector_store %arg7[%c0_37, %c0_38], %68 {strides = array<i32>} : memref<1x128xf32, #tpu.memory_space<vmem>>, vector<1x128xf32>,
      %cst_39 = arith.constant 0.000000e+00 : f32
      %70 = vector.broadcast %cst_39 : f32 to vector<1x128xf32>
      %c0_40 = arith.constant 0 : index
      %c0_41 = arith.constant 0 : index
      %71 = vector.load %arg8[%c0_40, %c0_41] : memref<1x128xf32, #tpu.memory_space<vmem>>, vector<1x128xf32>
      tpu.vector_store %arg8[%c0_40, %c0_41], %70 {strides = array<i32>} : memref<1x128xf32, #tpu.memory_space<vmem>>, vector<1x128xf32>,
      %cst_42 = arith.constant 0.000000e+00 : f32
      %72 = vector.broadcast %cst_42 : f32 to vector<1x128xf32>
      %c0_43 = arith.constant 0 : index
      %c0_44 = arith.constant 0 : index
      %73 = vector.load %arg9[%c0_43, %c0_44] : memref<1x128xf32, #tpu.memory_space<vmem>>, vector<1x128xf32>
      tpu.vector_store %arg9[%c0_43, %c0_44], %72 {strides = array<i32>} : memref<1x128xf32, #tpu.memory_space<vmem>>, vector<1x128xf32>,
      %cst_45 = arith.constant 0.000000e+00 : f32
      %74 = vector.broadcast %cst_45 : f32 to vector<1x128xf32>
      %c0_46 = arith.constant 0 : index
      %c0_47 = arith.constant 0 : index
      %75 = vector.load %arg10[%c0_46, %c0_47] : memref<1x128xf32, #tpu.memory_space<vmem>>, vector<1x128xf32>
      tpu.vector_store %arg10[%c0_46, %c0_47], %74 {strides = array<i32>} : memref<1x128xf32, #tpu.memory_space<vmem>>, vector<1x128xf32>,
    } else {
    }
    %c0 = arith.constant 0 : index
    %c0_1 = arith.constant 0 : index
    %3 = vector.load %arg2[%c0, %c0_1] : memref<2x128xf32, #tpu.memory_space<vmem>>, vector<2x128xf32>
    %c0_2 = arith.constant 0 : index
    %c0_3 = arith.constant 0 : index
    %4 = vector.load %arg3[%c0_2, %c0_3] : memref<1x128xi32, #tpu.memory_space<vmem>>, vector<1x128xi32>
    %cst = arith.constant dense<0xFF800000> : vector<128xf32>
    %5 = vector.multi_reduction <maximumf>, %3, %cst [0] : vector<2x128xf32> to vector<128xf32>
    %6 = vector.shape_cast %5 : vector<128xf32> to vector<1x128xf32>
    %7 = vector.broadcast %6 : vector<1x128xf32> to vector<2x128xf32>
    %8 = arith.subf %3, %7 : vector<2x128xf32>
    %9 = math.exp %8 : vector<2x128xf32>
    %cst_4 = arith.constant dense<0.000000e+00> : vector<128xf32>
    %10 = vector.multi_reduction <add>, %9, %cst_4 [0] : vector<2x128xf32> to vector<128xf32>
    %11 = vector.shape_cast %10 : vector<128xf32> to vector<1x128xf32>
    %12 = math.log %11 : vector<1x128xf32>
    %13 = arith.addf %6, %12 : vector<1x128xf32>
    %14 = tpu.iota {dimensions = array<i32: 0>} : vector<2x128xi32>
    %15 = vector.broadcast %4 : vector<1x128xi32> to vector<2x128xi32>
    %16 = arith.cmpi eq, %14, %15 : vector<2x128xi32>
    %cst_5 = arith.constant 0.000000e+00 : f32
    %17 = vector.broadcast %cst_5 : f32 to vector<2x128xf32>
    %18 = arith.select %16, %3, %17 : vector<2x128xi1>, vector<2x128xf32>
    %cst_6 = arith.constant dense<0.000000e+00> : vector<128xf32>
    %19 = vector.multi_reduction <add>, %18, %cst_6 [0] : vector<2x128xf32> to vector<128xf32>
    %20 = vector.shape_cast %19 : vector<128xf32> to vector<1x128xf32>
    %c-100_i32 = arith.constant -100 : i32
    %21 = vector.broadcast %c-100_i32 : i32 to vector<1x128xi32>
    %22 = arith.cmpi ne, %4, %21 : vector<1x128xi32>
    %c0_7 = arith.constant 0 : index
    %c0_8 = arith.constant 0 : index
    %23 = vector.load %arg7[%c0_7, %c0_8] : memref<1x128xf32, #tpu.memory_space<vmem>>, vector<1x128xf32>
    %24 = arith.subf %13, %20 : vector<1x128xf32>
    %cst_9 = arith.constant 0.000000e+00 : f32
    %25 = vector.broadcast %cst_9 : f32 to vector<1x128xf32>
    %26 = arith.select %22, %24, %25 : vector<1x128xi1>, vector<1x128xf32>
    %27 = arith.addf %23, %26 : vector<1x128xf32>
    %c0_10 = arith.constant 0 : index
    %c0_11 = arith.constant 0 : index
    %28 = vector.load %arg7[%c0_10, %c0_11] : memref<1x128xf32, #tpu.memory_space<vmem>>, vector<1x128xf32>
    tpu.vector_store %arg7[%c0_10, %c0_11], %27 {strides = array<i32>} : memref<1x128xf32, #tpu.memory_space<vmem>>, vector<1x128xf32>,
    %c0_12 = arith.constant 0 : index
    %c0_13 = arith.constant 0 : index
    %29 = vector.load %arg8[%c0_12, %c0_13] : memref<1x128xf32, #tpu.memory_space<vmem>>, vector<1x128xf32>
    %30 = arith.extui %22 : vector<1x128xi1> to vector<1x128xi32>
    %31 = arith.sitofp %30 : vector<1x128xi32> to vector<1x128xf32>
    %32 = arith.addf %29, %31 : vector<1x128xf32>
    %c0_14 = arith.constant 0 : index
    %c0_15 = arith.constant 0 : index
    %33 = vector.load %arg8[%c0_14, %c0_15] : memref<1x128xf32, #tpu.memory_space<vmem>>, vector<1x128xf32>
    tpu.vector_store %arg8[%c0_14, %c0_15], %32 {strides = array<i32>} : memref<1x128xf32, #tpu.memory_space<vmem>>, vector<1x128xf32>,
    %c0_16 = arith.constant 0 : index
    %c0_17 = arith.constant 0 : index
    %34 = vector.load %arg4[%c0_16, %c0_17] : memref<5x128xf32, #tpu.memory_space<vmem>>, vector<5x128xf32>
    %c0_18 = arith.constant 0 : index
    %c0_19 = arith.constant 0 : index
    %35 = vector.load %arg5[%c0_18, %c0_19] : memref<1x128xi32, #tpu.memory_space<vmem>>, vector<1x128xi32>
    %cst_20 = arith.constant dense<0xFF800000> : vector<128xf32>
    %36 = vector.multi_reduction <maximumf>, %34, %cst_20 [0] : vector<5x128xf32> to vector<128xf32>
    %37 = vector.shape_cast %36 : vector<128xf32> to vector<1x128xf32>
    %38 = vector.broadcast %37 : vector<1x128xf32> to vector<5x128xf32>
    %39 = arith.subf %34, %38 : vector<5x128xf32>
    %40 = math.exp %39 : vector<5x128xf32>
    %cst_21 = arith.constant dense<0.000000e+00> : vector<128xf32>
    %41 = vector.multi_reduction <add>, %40, %cst_21 [0] : vector<5x128xf32> to vector<128xf32>
    %42 = vector.shape_cast %41 : vector<128xf32> to vector<1x128xf32>
    %43 = math.log %42 : vector<1x128xf32>
    %44 = arith.addf %37, %43 : vector<1x128xf32>
    %45 = tpu.iota {dimensions = array<i32: 0>} : vector<5x128xi32>
    %46 = vector.broadcast %35 : vector<1x128xi32> to vector<5x128xi32>
    %47 = arith.cmpi eq, %45, %46 : vector<5x128xi32>
    %cst_22 = arith.constant 0.000000e+00 : f32
    %48 = vector.broadcast %cst_22 : f32 to vector<5x128xf32>
    %49 = arith.select %47, %34, %48 : vector<5x128xi1>, vector<5x128xf32>
    %cst_23 = arith.constant dense<0.000000e+00> : vector<128xf32>
    %50 = vector.multi_reduction <add>, %49, %cst_23 [0] : vector<5x128xf32> to vector<128xf32>
    %51 = vector.shape_cast %50 : vector<128xf32> to vector<1x128xf32>
    %c-100_i32_24 = arith.constant -100 : i32
    %52 = vector.broadcast %c-100_i32_24 : i32 to vector<1x128xi32>
    %53 = arith.cmpi ne, %35, %52 : vector<1x128xi32>
    %c0_25 = arith.constant 0 : index
    %c0_26 = arith.constant 0 : index
    %54 = vector.load %arg9[%c0_25, %c0_26] : memref<1x128xf32, #tpu.memory_space<vmem>>, vector<1x128xf32>
    %55 = arith.subf %44, %51 : vector<1x128xf32>
    %cst_27 = arith.constant 0.000000e+00 : f32
    %56 = vector.broadcast %cst_27 : f32 to vector<1x128xf32>
    %57 = arith.select %53, %55, %56 : vector<1x128xi1>, vector<1x128xf32>
    %58 = arith.addf %54, %57 : vector<1x128xf32>
    %c0_28 = arith.constant 0 : index
    %c0_29 = arith.constant 0 : index
    %59 = vector.load %arg9[%c0_28, %c0_29] : memref<1x128xf32, #tpu.memory_space<vmem>>, vector<1x128xf32>
    tpu.vector_store %arg9[%c0_28, %c0_29], %58 {strides = array<i32>} : memref<1x128xf32, #tpu.memory_space<vmem>>, vector<1x128xf32>,
    %c0_30 = arith.constant 0 : index
    %c0_31 = arith.constant 0 : index
    %60 = vector.load %arg10[%c0_30, %c0_31] : memref<1x128xf32, #tpu.memory_space<vmem>>, vector<1x128xf32>
    %61 = arith.extui %53 : vector<1x128xi1> to vector<1x128xi32>
    %62 = arith.sitofp %61 : vector<1x128xi32> to vector<1x128xf32>
    %63 = arith.addf %60, %62 : vector<1x128xf32>
    %c0_32 = arith.constant 0 : index
    %c0_33 = arith.constant 0 : index
    %64 = vector.load %arg10[%c0_32, %c0_33] : memref<1x128xf32, #tpu.memory_space<vmem>>, vector<1x128xf32>
    tpu.vector_store %arg10[%c0_32, %c0_33], %63 {strides = array<i32>} : memref<1x128xf32, #tpu.memory_space<vmem>>, vector<1x128xf32>,
    %c0_i32_34 = arith.constant 0 : i32
    %65 = arith.cmpi eq, %arg0, %c0_i32_34 : i32
    %66 = arith.extui %65 : i1 to i32
    %c0_i32_35 = arith.constant 0 : i32
    %67 = arith.cmpi ne, %66, %c0_i32_35 : i32
    scf.if %67 {
      %c0_36 = arith.constant 0 : index
      %c0_37 = arith.constant 0 : index
      %68 = vector.load %arg7[%c0_36, %c0_37] : memref<1x128xf32, #tpu.memory_space<vmem>>, vector<1x128xf32>
      %69 = vector.shape_cast %68 : vector<1x128xf32> to vector<1x1x128xf32>
      %cst_38 = arith.constant dense<0.000000e+00> : vector<1xf32>
      %70 = vector.multi_reduction <add>, %69, %cst_38 [1, 2] : vector<1x1x128xf32> to vector<1xf32>
      %71 = vector.shape_cast %70 : vector<1xf32> to vector<1x1x1xf32>
      %72 = vector.extract %71[0, 0, 0] : f32 from vector<1x1x1xf32>
      %c0_39 = arith.constant 0 : index
      %c0_40 = arith.constant 0 : index
      %73 = vector.load %arg8[%c0_39, %c0_40] : memref<1x128xf32, #tpu.memory_space<vmem>>, vector<1x128xf32>
      %74 = vector.shape_cast %73 : vector<1x128xf32> to vector<1x1x128xf32>
      %cst_41 = arith.constant dense<0.000000e+00> : vector<1xf32>
      %75 = vector.multi_reduction <add>, %74, %cst_41 [1, 2] : vector<1x1x128xf32> to vector<1xf32>
      %76 = vector.shape_cast %75 : vector<1xf32> to vector<1x1x1xf32>
      %77 = vector.extract %76[0, 0, 0] : f32 from vector<1x1x1xf32>
      %c0_42 = arith.constant 0 : index
      %c0_43 = arith.constant 0 : index
      %78 = vector.load %arg9[%c0_42, %c0_43] : memref<1x128xf32, #tpu.memory_space<vmem>>, vector<1x128xf32>
      %79 = vector.shape_cast %78 : vector<1x128xf32> to vector<1x1x128xf32>
      %cst_44 = arith.constant dense<0.000000e+00> : vector<1xf32>
      %80 = vector.multi_reduction <add>, %79, %cst_44 [1, 2] : vector<1x1x128xf32> to vector<1xf32>
      %81 = vector.shape_cast %80 : vector<1xf32> to vector<1x1x1xf32>
      %82 = vector.extract %81[0, 0, 0] : f32 from vector<1x1x1xf32>
      %c0_45 = arith.constant 0 : index
      %c0_46 = arith.constant 0 : index
      %83 = vector.load %arg10[%c0_45, %c0_46] : memref<1x128xf32, #tpu.memory_space<vmem>>, vector<1x128xf32>
      %84 = vector.shape_cast %83 : vector<1x128xf32> to vector<1x1x128xf32>
      %cst_47 = arith.constant dense<0.000000e+00> : vector<1xf32>
      %85 = vector.multi_reduction <add>, %84, %cst_47 [1, 2] : vector<1x1x128xf32> to vector<1xf32>
      %86 = vector.shape_cast %85 : vector<1xf32> to vector<1x1x1xf32>
      %87 = vector.extract %86[0, 0, 0] : f32 from vector<1x1x1xf32>
      %cst_48 = arith.constant 0.000000e+00 : f32
      %88 = arith.cmpf ogt, %77, %cst_48 : f32
      %cst_49 = arith.constant 1.000000e+00 : f32
      %89 = arith.maximumf %77, %cst_49 : f32
      %90 = arith.divf %72, %89 : f32
      %cst_50 = arith.constant 0.000000e+00 : f32
      %91 = arith.select %88, %90, %cst_50 : f32
      %cst_51 = arith.constant 0.000000e+00 : f32
      %92 = arith.cmpf ogt, %87, %cst_51 : f32
      %cst_52 = arith.constant 1.000000e+00 : f32
      %93 = arith.maximumf %87, %cst_52 : f32
      %94 = arith.divf %82, %93 : f32
      %cst_53 = arith.constant 0.000000e+00 : f32
      %95 = arith.select %92, %94, %cst_53 : f32
      %c0_54 = arith.constant 0 : index
      %c0_55 = arith.constant 0 : index
      %96 = vector.load %arg1[%c0_54, %c0_55] : memref<1x1xf32, #tpu.memory_space<vmem>>, vector<1x1xf32>
      %cst_56 = arith.constant 0.000000e+00 : f32
      %97 = arith.cmpf one, %95, %cst_56 : f32
      %cst_57 = arith.constant 1.000000e+00 : f32
      %98 = arith.select %97, %95, %cst_57 : f32
      %cst_58 = arith.constant 0.000000e+00 : f32
      %99 = arith.cmpf one, %95, %cst_58 : f32
      %100 = arith.divf %91, %98 : f32
      %cst_59 = arith.constant 0.000000e+00 : f32
      %101 = arith.select %99, %100, %cst_59 : f32
      %cst_60 = arith.constant -1.000000e+00 : f32
      %102 = vector.broadcast %cst_60 : f32 to vector<1x1xf32>
      %103 = arith.cmpf oeq, %96, %102 : vector<1x1xf32>
      %104 = vector.broadcast %101 : f32 to vector<1x1xf32>
      %105 = arith.select %103, %104, %96 : vector<1x1xi1>, vector<1x1xf32>
      %106 = vector.broadcast %95 : f32 to vector<1x1xf32>
      %107 = arith.mulf %105, %106 : vector<1x1xf32>
      %108 = vector.broadcast %91 : f32 to vector<1x1xf32>
      %109 = arith.addf %107, %108 : vector<1x1xf32>
      %110 = tpu.iota {dimensions = array<i32: 1>} : vector<1x128xi32>
      %c0_i32_61 = arith.constant 0 : i32
      %111 = vector.broadcast %c0_i32_61 : i32 to vector<1x128xi32>
      %112 = arith.cmpi eq, %110, %111 : vector<1x128xi32>
      %c1_i32 = arith.constant 1 : i32
      %113 = vector.broadcast %c1_i32 : i32 to vector<1x128xi32>
      %114 = arith.cmpi eq, %110, %113 : vector<1x128xi32>
      %c2_i32 = arith.constant 2 : i32
      %115 = vector.broadcast %c2_i32 : i32 to vector<1x128xi32>
      %116 = arith.cmpi eq, %110, %115 : vector<1x128xi32>
      %cst_62 = arith.constant 0.000000e+00 : f32
      %117 = vector.shape_cast %109 : vector<1x1xf32> to vector<1x1xf32>
      %118 = vector.broadcast %117 : vector<1x1xf32> to vector<1x128xf32>
      %119 = vector.broadcast %cst_62 : f32 to vector<1x128xf32>
      %120 = arith.select %116, %118, %119 : vector<1x128xi1>, vector<1x128xf32>
      %121 = vector.broadcast %95 : f32 to vector<1x128xf32>
      %122 = arith.select %114, %121, %120 : vector<1x128xi1>, vector<1x128xf32>
      %123 = vector.broadcast %91 : f32 to vector<1x128xf32>
      %124 = arith.select %112, %123, %122 : vector<1x128xi1>, vector<1x128xf32>
      %c0_63 = arith.constant 0 : index
      %c0_64 = arith.constant 0 : index
      %125 = vector.load %arg6[%c0_63, %c0_64] : memref<1x128xf32, #tpu.memory_space<vmem>>, vector<1x128xf32>
      tpu.vector_store %arg6[%c0_63, %c0_64], %124 {strides = array<i32>} : memref<1x128xf32, #tpu.memory_space<vmem>>, vector<1x128xf32>,
    } else {
    }
    return
  }
  func.func @transform_0(%arg0: i32) -> (i32, i32) {
    %c0_i32 = arith.constant 0 : i32
    %c0_i32_0 = arith.constant 0 : i32
    %c0_i32_1 = arith.constant 0 : i32
    return %c0_i32, %c0_i32_0 : i32, i32
  }
  func.func @transform_1(%arg0: i32) -> (i32, i32) {
    %c0_i32 = arith.constant 0 : i32
    %c0_i32_0 = arith.constant 0 : i32
    return %c0_i32, %arg0 : i32, i32
  }
  func.func @transform_2(%arg0: i32) -> (i32, i32) {
    %c0_i32 = arith.constant 0 : i32
    %c0_i32_0 = arith.constant 0 : i32
    return %c0_i32, %arg0 : i32, i32
  }
  func.func @transform_3(%arg0: i32) -> (i32, i32) {
    %c0_i32 = arith.constant 0 : i32
    %c0_i32_0 = arith.constant 0 : i32
    return %c0_i32, %arg0 : i32, i32
  }
  func.func @transform_4(%arg0: i32) -> (i32, i32) {
    %c0_i32 = arith.constant 0 : i32
    %c0_i32_0 = arith.constant 0 : i32
    return %c0_i32, %arg0 : i32, i32
  }
  func.func @transform_5(%arg0: i32) -> (i32, i32) {
    %c0_i32 = arith.constant 0 : i32
    %c0_i32_0 = arith.constant 0 : i32
    %c0_i32_1 = arith.constant 0 : i32
    return %c0_i32, %c0_i32_0 : i32, i32
  }
}

</mosaic_0001>

<llo_original>
// kernel: graph_layout_loss.1
$region0: #{graph_layout_loss.1}
  #allocation0 [shape = 'u32[]', space=smem, size = 0x4, offset = 0x4, fixed_abs, tag = 'smem constant byte address 0x4 - core index']
  #allocation1 [shape = 'u32[144,128]{1,0:T(1,128)}', space=vmem, size = 0x12000, scoped, tag = 'internal scratch']
  #allocation2 [shape = 'f32[1,128]{1,0:T(1,128)}', space=vmem, size = 0x200, scoped, tag = 'scratch operand']
  #allocation3 [shape = 'f32[1,128]{1,0:T(1,128)}', space=vmem, size = 0x200, scoped, tag = 'scratch operand']
  #allocation4 [shape = 'f32[1,128]{1,0:T(1,128)}', space=vmem, size = 0x200, scoped, tag = 'scratch operand']
  #allocation5 [shape = 'f32[1,128]{1,0:T(1,128)}', space=vmem, size = 0x200, scoped, tag = 'scratch operand']
  #allocation6 [shape = 'f32[1,1]{1,0:T(1,128)S(1)}', space=vmem, size = 0x200, scoped, tag = 'scoped memory for graph_layout_loss.1']
  %s0 = inlined_call_operand.<no memory space> [shape: f32[1,1], index: 0, kind: input, shape index: {}]
  %s1 = inlined_call_operand.vmem [shape: f32[2,128], index: 1, kind: input, shape index: {}]
  %s2 = inlined_call_operand.vmem [shape: s32[1,128], index: 2, kind: input, shape index: {}]
  %s3 = inlined_call_operand.vmem [shape: f32[5,128], index: 3, kind: input, shape index: {}]
  %s4 = inlined_call_operand.vmem [shape: s32[1,128], index: 4, kind: input, shape index: {}]
  %s5 = inlined_call_operand.vmem [shape: f32[1,128], index: 5, kind: output, shape index: {}]
  %s6 = sld [smem:[#allocation0]]
  $region38: #{graph_layout_loss.1} parent=0
    _
  %s8 = ssub.s32 1, %s6
  %s9 = scalar_select 0, %s8, %s6
  %v10 = vstv %s0
  %11 = vst [vmem:[#allocation6] sm:$0x1] %v10
  // Predicated region
  $region2: #{graph_layout_loss.1} parent=0 // pred_check
    _
  $region3: #{graph_layout_loss.1} parent=0 // pred_check_branch
    %13 = sbr.rel (0) target = $region5
  $region4: #{graph_layout_loss.1} parent=0 // pred_region
    _
  $region5: #{graph_layout_loss.1} parent=0 // pred_fallthru
    _
  // Predicated region
  $region6: #{graph_layout_loss.1} parent=0 // pred_check
    _
  $region7: #{graph_layout_loss.1} parent=0 // pred_check_branch
    %15 = sbr.rel (0) target = $region9
  $region8: #{graph_layout_loss.1} parent=0 // pred_region
    _
  $region9: #{graph_layout_loss.1} parent=0 // pred_fallthru
    _
  // Predicated region
  $region10: #{graph_layout_loss.1} parent=0 // pred_check
    _
  $region11: #{graph_layout_loss.1} parent=0 // pred_check_branch
    %17 = sbr.rel (0) target = $region13
  $region12: #{graph_layout_loss.1} parent=0 // pred_region
    _
  $region13: #{graph_layout_loss.1} parent=0 // pred_fallthru
    _
  // Predicated region
  $region14: #{graph_layout_loss.1} parent=0 // pred_check
    _
  $region15: #{graph_layout_loss.1} parent=0 // pred_check_branch
    %19 = sbr.rel (0) target = $region17
  $region16: #{graph_layout_loss.1} parent=0 // pred_region
    _
  $region17: #{graph_layout_loss.1} parent=0 // pred_fallthru
    _
  // Predicated region
  $region18: #{graph_layout_loss.1} parent=0 // pred_check
    _
  $region19: #{graph_layout_loss.1} parent=0 // pred_check_branch
    %21 = sbr.rel (0) target = $region21
  $region20: #{graph_layout_loss.1} parent=0 // pred_region
    _
  $region21: #{graph_layout_loss.1} parent=0 // pred_fallthru
    _
  %p22 = scmp.eq.s32.totalorder 0, 0
  // Predicated region
  $region22: #{graph_layout_loss.1} parent=0 // pred_check
    %p23 = pneg %p22
  $region23: #{graph_layout_loss.1} parent=0 // pred_check_branch
    %25 = sbr.rel (%p23) target = $region25
  $region24: #{graph_layout_loss.1} parent=0 // pred_region
    %26 = vst [vmem:[#allocation2] sm:$0x1] 0.0
    %27 = vst [vmem:[#allocation3] sm:$0x1] 0.0
    %28 = vst [vmem:[#allocation4] sm:$0x1] 0.0
    %29 = vst [vmem:[#allocation5] sm:$0x1] 0.0
  $region25: #{graph_layout_loss.1} parent=0 // pred_fallthru
    _
  %v30 = vld [vmem:[%s1] sm:$0x3]
  %v31 = vld [vmem:[%s2] sm:$0x1]
  %vm32 = vcmask 1041408
  %v33 = vsel %vm32, %v30, -inf
  %v34 = vrot.slane %v33, 4
  %v35 = vmax.f32 %v33, %v34
  %v36 = vrot.slane %v35, 2
  %v37 = vmax.f32 %v35, %v36
  %v38 = vrot.slane %v37, 1
  %v39 = vmax.f32 %v37, %v38
  %v40 = vsub.f32 %v30, %v39
  %v41 = vmul.f32 %v40, 1.442695
  %v42 = vpow.pop %v41
  %v43 = vsel %vm32, %v42, 0.0
  %v44 = vrot.slane %v43, 4
  %v45 = vadd.f32 %v43, %v44
  %v46 = vrot.slane %v45, 2
  %v47 = vadd.f32 %v45, %v46
  %v48 = vrot.slane %v47, 1
  %v49 = vadd.f32 %v47, %v48
  %v50 = vlog2.pop %v49
  %v51 = vmul.f32 %v50, 0.6931472
  %v52 = vadd.f32 %v39, %v51
  %v53 = vlaneseq
  %v54 = vshrl.u32 %v53, 7
  %v55 = vlaneseq
  %v56 = vshrl.u32 %v55, 7
  %v57 = vsub.s32 0, %v56
  %v58 = vrot.slane %v31, %v57
  %vm59 = vcmp.eq.s32.totalorder %v54, %v58
  %v60 = vsel %vm59, %v30, 0.0
  %v61 = vsel %vm32, %v60, 0.0
  %v62 = vrot.slane %v61, 4
  %v63 = vadd.f32 %v61, %v62
  %v64 = vrot.slane %v63, 2
  %v65 = vadd.f32 %v63, %v64
  %v66 = vrot.slane %v65, 1
  %v67 = vadd.f32 %v65, %v66
  %vm68 = vcmp.ne.s32.totalorder %v31, 4294967196
  %v69 = vld [vmem:[#allocation2] sm:$0x1]
  %v70 = vsub.f32 %v52, %v67
  %v71 = vsel %vm68, %v70, 0.0
  %v72 = vadd.f32 %v69, %v71
  %73 = vst [vmem:[#allocation2] sm:$0x1] %v72
  %v74 = vld [vmem:[#allocation3] sm:$0x1]
  %v75 = vsel %vm68, 1, 0
  %v76 = vcvt.s32.f32 %v75
  %v77 = vadd.f32 %v74, %v76
  %78 = vst [vmem:[#allocation3] sm:$0x1] %v77
  %v79 = vld [vmem:[%s3] sm:$0x1f]
  %v80 = vld [vmem:[%s4] sm:$0x1]
  %vm81 = vcmask 1044480
  %v82 = vsel %vm81, %v79, -inf
  %v83 = vrot.slane %v82, 4
  %v84 = vmax.f32 %v82, %v83
  %v85 = vrot.slane %v84, 2
  %v86 = vmax.f32 %v84, %v85
  %v87 = vrot.slane %v86, 1
  %v88 = vmax.f32 %v86, %v87
  %v89 = vsub.f32 %v79, %v88
  %v90 = vmul.f32 %v89, 1.442695
  %v91 = vpow.pop %v90
  %v92 = vsel %vm81, %v91, 0.0
  %v93 = vrot.slane %v92, 4
  %v94 = vadd.f32 %v92, %v93
  %v95 = vrot.slane %v94, 2
  %v96 = vadd.f32 %v94, %v95
  %v97 = vrot.slane %v96, 1
  %v98 = vadd.f32 %v96, %v97
  %v99 = vlog2.pop %v98
  %v100 = vmul.f32 %v99, 0.6931472
  %v101 = vadd.f32 %v88, %v100
  %v102 = vlaneseq
  %v103 = vshrl.u32 %v102, 7
  %v104 = vsub.s32 0, %v103
  %v105 = vrot.slane %v80, %v104
  %vm106 = vcmp.eq.s32.totalorder %v54, %v105
  %v107 = vsel %vm106, %v79, 0.0
  %v108 = vsel %vm81, %v107, 0.0
  %v109 = vrot.slane %v108, 4
  %v110 = vadd.f32 %v108, %v109
  %v111 = vrot.slane %v110, 2
  %v112 = vadd.f32 %v110, %v111
  %v113 = vrot.slane %v112, 1
  %v114 = vadd.f32 %v112, %v113
  %vm115 = vcmp.ne.s32.totalorder %v80, 4294967196
  %v116 = vld [vmem:[#allocation4] sm:$0x1]
  %v117 = vsub.f32 %v101, %v114
  %v118 = vsel %vm115, %v117, 0.0
  %v119 = vadd.f32 %v116, %v118
  %120 = vst [vmem:[#allocation4] sm:$0x1] %v119
  %v121 = vld [vmem:[#allocation5] sm:$0x1]
  %v122 = vsel %vm115, 1, 0
  %v123 = vcvt.s32.f32 %v122
  %v124 = vadd.f32 %v121, %v123
  %125 = vst [vmem:[#allocation5] sm:$0x1] %v124
  // Predicated region
  $region26: #{graph_layout_loss.1} parent=0 // pred_check
    %p126 = pneg %p22
  $region27: #{graph_layout_loss.1} parent=0 // pred_check_branch
    %128 = sbr.rel (%p126) target = $region29
  $region28: #{graph_layout_loss.1} parent=0 // pred_region
    %v129 = vld [vmem:[#allocation2] sm:$0x1]
    %vm130 = vcmask 1040384
    %v131 = vsel %vm130, %v129, 0.0
    %132 = vadd.xlane.f32.xlu0 %v131
    %v133 = vpop.xlane.xlu0 %132
    %v134 = vrot.slane %v133, 4
    %v135 = vadd.f32 %v133, %v134
    %v136 = vrot.slane %v135, 2
    %v137 = vadd.f32 %v135, %v136
    %v138 = vrot.slane %v137, 1
    %v139 = vadd.f32 %v137, %v138
    %s140 = vtos %v139
    %v141 = vld [vmem:[#allocation3] sm:$0x1]
    %v142 = vsel %vm130, %v141, 0.0
    %143 = vadd.xlane.f32.xlu0 %v142
    %v144 = vpop.xlane.xlu0 %143
    %v145 = vrot.slane %v144, 4
    %v146 = vadd.f32 %v144, %v145
    %v147 = vrot.slane %v146, 2
    %v148 = vadd.f32 %v146, %v147
    %v149 = vrot.slane %v148, 1
    %v150 = vadd.f32 %v148, %v149
    %s151 = vtos %v150
    %v152 = vld [vmem:[#allocation4] sm:$0x1]
    %v153 = vsel %vm130, %v152, 0.0
    %154 = vadd.xlane.f32.xlu0 %v153
    %v155 = vpop.xlane.xlu0 %154
    %v156 = vrot.slane %v155, 4
    %v157 = vadd.f32 %v155, %v156
    %v158 = vrot.slane %v157, 2
    %v159 = vadd.f32 %v157, %v158
    %v160 = vrot.slane %v159, 1
    %v161 = vadd.f32 %v159, %v160
    %s162 = vtos %v161
    %v163 = vld [vmem:[#allocation5] sm:$0x1]
    %v164 = vsel %vm130, %v163, 0.0
    %165 = vadd.xlane.f32.xlu0 %v164
    %v166 = vpop.xlane.xlu0 %165
    %v167 = vrot.slane %v166, 4
    %v168 = vadd.f32 %v166, %v167
    %v169 = vrot.slane %v168, 2
    %v170 = vadd.f32 %v168, %v169
    %v171 = vrot.slane %v170, 1
    %v172 = vadd.f32 %v170, %v171
    %s173 = vtos %v172
    %p174 = scmp.gt.f32.partialorder %s151, 0.0
    %s175 = smax.f32 %s151, 1.0
    %v176 = vstv %s175
    %v177 = vrcp.pop %v176
    %s178 = vtos %v177
    %s179 = smul.f32 %s140, %s178
    %s180 = scalar_select %p174, %s179, 0.0
    %p181 = scmp.gt.f32.partialorder %s173, 0.0
    %s182 = smax.f32 %s173, 1.0
    %v183 = vstv %s182
    %v184 = vrcp.pop %v183
    %s185 = vtos %v184
    %s186 = smul.f32 %s162, %s185
    %s187 = scalar_select %p181, %s186, 0.0
    %v188 = vld [vmem:[#allocation6] sm:$0x1]
    %p189 = scmp.ne.f32.partialorder %s187, 0.0
    %s190 = scalar_select %p189, %s187, 1.0
    %v191 = vstv %s190
    %v192 = vrcp.pop %v191
    %s193 = vtos %v192
    %s194 = smul.f32 %s180, %s193
    %s195 = scalar_select %p189, %s194, 0.0
    %vm196 = vcmp.eq.f32.partialorder %v188, -1.0
    %v197 = vstv %s195
    %v198 = vsel %vm196, %v197, %v188
    %v199 = vstv %s187
    %v200 = vmul.f32 %v198, %v199
    %v201 = vstv %s180
    %v202 = vadd.f32 %v200, %v201
    %v203 = vlaneseq
    %v204 = vand.u32 %v203, 127
    %vm205 = vcmp.eq.s32.totalorder %v204, 0
    %vm206 = vcmp.eq.s32.totalorder %v204, 1
    %vm207 = vcmp.eq.s32.totalorder %v204, 2
    %209 = vset.pattern.permute.xlu0 0
    %210 = vperm.xlu0 %209, %v202
    %v211 = vpop.permute.xlu0 %210
    %v213 = vlaneseq
    %v214 = vshrl.u32 %v213, 7
    %v215 = vsub.s32 0, %v214
    %v216 = vrot.slane %v211, %v215
    %v217 = vsel %vm207, %v216, 0.0
    %v218 = vsel %vm206, %v199, %v217
    %v219 = vsel %vm205, %v201, %v218
    %220 = vst [vmem:[%s5] sm:$0x1] %v219
  $region29: #{graph_layout_loss.1} parent=0 // pred_fallthru
    _
  // Predicated region
  $region30: #{graph_layout_loss.1} parent=0 // pred_check
    _
  $region31: #{graph_layout_loss.1} parent=0 // pred_check_branch
    %222 = sbr.rel (0) target = $region33
  $region32: #{graph_layout_loss.1} parent=0 // pred_region
    _
  $region33: #{graph_layout_loss.1} parent=0 // pred_fallthru
    _
  // Predicated region
  $region34: #{graph_layout_loss.1} parent=0 // pred_check
    _
  $region35: #{graph_layout_loss.1} parent=0 // pred_check_branch
    %224 = sbr.rel (0) target = $region37
  $region36: #{graph_layout_loss.1} parent=0 // pred_region
    _
  $region37: #{graph_layout_loss.1} parent=0 // pred_fallthru
    _

</llo_original>
